<compile_context>
chip_gen: v7x
topology: tpu7x:2x2x1
jax: 0.10.0
libtpu: 0.0.40
codegen_flags: <defaults>
</compile_context>

<pallas_src>
import functools

import jax
import jax.numpy as jnp
from jax.experimental import pallas as pl
from jax.experimental.pallas import tpu as pltpu


def _round_up(n, m):
    return (n + m - 1) // m * m


def _fc_kernel(x_ref, w1_ref, b1_ref, w2_ref, b2_ref, w4_ref, b4_ref, o_ref):
    # Fused 3-layer MLP on one batch tile. bf16 operands on the MXU, f32 accumulation.
    x = x_ref[...]                                                       # (tile_b, in_p) bf16
    h1 = jnp.dot(x, w1_ref[...], preferred_element_type=jnp.float32) + b1_ref[...]
    h1 = jnp.maximum(h1, 0.0).astype(jnp.bfloat16)                       # ReLU (dropout p=0)
    h2 = jnp.dot(h1, w2_ref[...], preferred_element_type=jnp.float32) + b2_ref[...]
    h2 = jnp.maximum(h2, 0.0).astype(jnp.bfloat16)                       # ReLU (dropout p=0)
    out = jnp.dot(h2, w4_ref[...], preferred_element_type=jnp.float32) + b4_ref[...]
    o_ref[...] = out.astype(o_ref.dtype)


def _pad2(a, rows, cols, dtype):
    a = a.astype(dtype)
    return jnp.pad(a, ((0, rows - a.shape[0]), (0, cols - a.shape[1])))


@functools.partial(jax.jit, static_argnames=("block_b",))
def simple_fc_forward(x, params, block_b=256):
    """Run the fused MLP kernel. x: (B, input_size) float32. Returns f32 (B, output_size)."""
    w1, b1, w2, b2, w4, b4 = params            # weights stored pre-transposed: (in, out)
    B, in_dim = x.shape
    hid = w1.shape[1]
    out_dim = w4.shape[1]

    # Lane-dense padding of feature dims to multiples of 128 (exact: zero pad).
    in_p = _round_up(in_dim, 128)
    hid_p = _round_up(hid, 128)
    out_p = _round_up(out_dim, 128)

    # Batch tile: as large as requested, capped at the (8-aligned) padded batch.
    tile_b = min(block_b, _round_up(B, 8))
    B_p = _round_up(B, tile_b)
    grid = (B_p // tile_b,)

    # Pad + cast operands outside the kernel (one-time layout plumbing).
    xp = _pad2(x, B_p, in_p, jnp.bfloat16)
    w1p = _pad2(w1, in_p, hid_p, jnp.bfloat16)
    w2p = _pad2(w2, hid_p, hid_p, jnp.bfloat16)
    w4p = _pad2(w4, hid_p, out_p, jnp.bfloat16)
    b1p = _pad2(b1, 1, hid_p, jnp.float32)
    b2p = _pad2(b2, 1, hid_p, jnp.float32)
    b4p = _pad2(b4, 1, out_p, jnp.float32)

    out_padded = pl.pallas_call(
        _fc_kernel,
        out_shape=jax.ShapeDtypeStruct((B_p, out_p), jnp.float32),
        grid_spec=pltpu.PrefetchScalarGridSpec(
            num_scalar_prefetch=0,
            grid=grid,
            in_specs=[
                pl.BlockSpec((tile_b, in_p), lambda i: (i, 0)),   # x batch tile
                pl.BlockSpec((in_p, hid_p), lambda i: (0, 0)),    # W1 (VMEM resident)
                pl.BlockSpec((1, hid_p), lambda i: (0, 0)),       # b1
                pl.BlockSpec((hid_p, hid_p), lambda i: (0, 0)),   # W2 (VMEM resident)
                pl.BlockSpec((1, hid_p), lambda i: (0, 0)),       # b2
                pl.BlockSpec((hid_p, out_p), lambda i: (0, 0)),   # W4 (VMEM resident)
                pl.BlockSpec((1, out_p), lambda i: (0, 0)),       # b4
            ],
            out_specs=pl.BlockSpec((tile_b, out_p), lambda i: (i, 0)),
        ),
        compiler_params=pltpu.CompilerParams(
            dimension_semantics=("parallel",),
        ),
    )(xp, w1p, b1p, w2p, b2p, w4p, b4p)

    return out_padded[:B, :out_dim]


def init_params(key, input_size, hidden_size, output_size, dtype=jnp.float32):
    """Deterministic init mimicking nn.Linear (uniform +/- 1/sqrt(fan_in)).

    Weights are stored already transposed to (in_features, out_features)."""
    ks = jax.random.split(key, 6)

    def linear(kw, kb, fan_in, fan_out):
        bound = 1.0 / jnp.sqrt(jnp.float32(fan_in))
        w = jax.random.uniform(kw, (fan_in, fan_out), dtype, -bound, bound)
        b = jax.random.uniform(kb, (1, fan_out), dtype, -bound, bound)
        return w, b

    w1, b1 = linear(ks[0], ks[1], input_size, hidden_size)
    w2, b2 = linear(ks[2], ks[3], hidden_size, hidden_size)
    w4, b4 = linear(ks[4], ks[5], hidden_size, output_size)
    return (w1, b1, w2, b2, w4, b4)


def reference_forward(x, params):
    w1, b1, w2, b2, w4, b4 = params
    h1 = jnp.maximum(x @ w1 + b1, 0.0)
    h2 = jnp.maximum(h1 @ w2 + b2, 0.0)
    return h2 @ w4 + b4


if __name__ == "__main__":
    input_size, hidden_size, output_size = 32, 32, 16
    batch = 16

    key = jax.random.PRNGKey(0)
    kx, kp = jax.random.split(key)
    x = jax.random.normal(kx, (batch, input_size), dtype=jnp.float32)
    params = init_params(kp, input_size, hidden_size, output_size)

    out = simple_fc_forward(x, params)
    out = jax.block_until_ready(out)

    ref = reference_forward(x, params)
    assert out.shape == (batch, output_size)
    # bf16 operands on the MXU (f32 accumulation) -> loosened tolerance vs f32 reference.
    assert jnp.allclose(out, ref, atol=5e-2, rtol=5e-2), "mismatch vs reference"

    print("KERNEL_OK")
</pallas_src>

<mosaic_0001>
module attributes {stable_mosaic.version = 11 : i64} {
  func.func @_fc_kernel(%arg0: i32, %arg1: memref<16x128xbf16, #tpu.memory_space<vmem>>, %arg2: memref<128x128xbf16, #tpu.memory_space<vmem>>, %arg3: memref<1x128xf32, #tpu.memory_space<vmem>>, %arg4: memref<128x128xbf16, #tpu.memory_space<vmem>>, %arg5: memref<1x128xf32, #tpu.memory_space<vmem>>, %arg6: memref<128x128xbf16, #tpu.memory_space<vmem>>, %arg7: memref<1x128xf32, #tpu.memory_space<vmem>>, %arg8: memref<16x128xf32, #tpu.memory_space<vmem>>) attributes {dimension_semantics = [#tpu.dimension_semantics<parallel>], iteration_bounds = array<i64: 1>, scalar_prefetch = 0 : i64, scratch_operands = 0 : i64, tpu.core_type = #tpu.core_type<tc>, window_params = [{transform_indices = @transform_0, window_bounds = array<i64: 16, 128>}, {pipeline_mode = #tpu.pipeline_mode<synchronous>, transform_indices = @transform_1, window_bounds = array<i64: 128, 128>}, {pipeline_mode = #tpu.pipeline_mode<synchronous>, transform_indices = @transform_2, window_bounds = array<i64: 1, 128>}, {pipeline_mode = #tpu.pipeline_mode<synchronous>, transform_indices = @transform_3, window_bounds = array<i64: 128, 128>}, {pipeline_mode = #tpu.pipeline_mode<synchronous>, transform_indices = @transform_4, window_bounds = array<i64: 1, 128>}, {pipeline_mode = #tpu.pipeline_mode<synchronous>, transform_indices = @transform_5, window_bounds = array<i64: 128, 128>}, {pipeline_mode = #tpu.pipeline_mode<synchronous>, transform_indices = @transform_6, window_bounds = array<i64: 1, 128>}, {transform_indices = @transform_7, window_bounds = array<i64: 16, 128>}]} {
    %c0 = arith.constant 0 : index
    %c0_0 = arith.constant 0 : index
    %0 = vector.load %arg1[%c0, %c0_0] : memref<16x128xbf16, #tpu.memory_space<vmem>>, vector<16x128xbf16>
    %c0_1 = arith.constant 0 : index
    %c0_2 = arith.constant 0 : index
    %1 = vector.load %arg2[%c0_1, %c0_2] : memref<128x128xbf16, #tpu.memory_space<vmem>>, vector<128x128xbf16>
    %cst = arith.constant dense<0.000000e+00> : vector<16x128xf32>
    %2 = tpu.matmul %0, %1, %cst {dimension_numbers = #tpu.dot_dimension_numbers<[1], [0], [0], [1], [0, 0, 1, 1], [], []>} : vector<16x128xbf16>, vector<128x128xbf16>, vector<16x128xf32> -> vector<16x128xf32>
    %c0_3 = arith.constant 0 : index
    %c0_4 = arith.constant 0 : index
    %3 = vector.load %arg3[%c0_3, %c0_4] : memref<1x128xf32, #tpu.memory_space<vmem>>, vector<1x128xf32>
    %4 = vector.broadcast %3 : vector<1x128xf32> to vector<16x128xf32>
    %5 = arith.addf %2, %4 : vector<16x128xf32>
    %cst_5 = arith.constant 0.000000e+00 : f32
    %6 = vector.broadcast %cst_5 : f32 to vector<16x128xf32>
    %7 = arith.maximumf %5, %6 : vector<16x128xf32>
    %8 = arith.truncf %7 : vector<16x128xf32> to vector<16x128xbf16>
    %c0_6 = arith.constant 0 : index
    %c0_7 = arith.constant 0 : index
    %9 = vector.load %arg4[%c0_6, %c0_7] : memref<128x128xbf16, #tpu.memory_space<vmem>>, vector<128x128xbf16>
    %cst_8 = arith.constant dense<0.000000e+00> : vector<16x128xf32>
    %10 = tpu.matmul %8, %9, %cst_8 {dimension_numbers = #tpu.dot_dimension_numbers<[1], [0], [0], [1], [0, 0, 1, 1], [], []>} : vector<16x128xbf16>, vector<128x128xbf16>, vector<16x128xf32> -> vector<16x128xf32>
    %c0_9 = arith.constant 0 : index
    %c0_10 = arith.constant 0 : index
    %11 = vector.load %arg5[%c0_9, %c0_10] : memref<1x128xf32, #tpu.memory_space<vmem>>, vector<1x128xf32>
    %12 = vector.broadcast %11 : vector<1x128xf32> to vector<16x128xf32>
    %13 = arith.addf %10, %12 : vector<16x128xf32>
    %cst_11 = arith.constant 0.000000e+00 : f32
    %14 = vector.broadcast %cst_11 : f32 to vector<16x128xf32>
    %15 = arith.maximumf %13, %14 : vector<16x128xf32>
    %16 = arith.truncf %15 : vector<16x128xf32> to vector<16x128xbf16>
    %c0_12 = arith.constant 0 : index
    %c0_13 = arith.constant 0 : index
    %17 = vector.load %arg6[%c0_12, %c0_13] : memref<128x128xbf16, #tpu.memory_space<vmem>>, vector<128x128xbf16>
    %cst_14 = arith.constant dense<0.000000e+00> : vector<16x128xf32>
    %18 = tpu.matmul %16, %17, %cst_14 {dimension_numbers = #tpu.dot_dimension_numbers<[1], [0], [0], [1], [0, 0, 1, 1], [], []>} : vector<16x128xbf16>, vector<128x128xbf16>, vector<16x128xf32> -> vector<16x128xf32>
    %c0_15 = arith.constant 0 : index
    %c0_16 = arith.constant 0 : index
    %19 = vector.load %arg7[%c0_15, %c0_16] : memref<1x128xf32, #tpu.memory_space<vmem>>, vector<1x128xf32>
    %20 = vector.broadcast %19 : vector<1x128xf32> to vector<16x128xf32>
    %21 = arith.addf %18, %20 : vector<16x128xf32>
    %c0_17 = arith.constant 0 : index
    %c0_18 = arith.constant 0 : index
    %22 = vector.load %arg8[%c0_17, %c0_18] : memref<16x128xf32, #tpu.memory_space<vmem>>, vector<16x128xf32>
    tpu.vector_store %arg8[%c0_17, %c0_18], %21 {strides = array<i32>} : memref<16x128xf32, #tpu.memory_space<vmem>>, vector<16x128xf32>,
    return
  }
  func.func @transform_0(%arg0: i32) -> (i32, i32) {
    %c0_i32 = arith.constant 0 : i32
    %c0_i32_0 = arith.constant 0 : i32
    return %arg0, %c0_i32 : i32, i32
  }
  func.func @transform_1(%arg0: i32) -> (i32, i32) {
    %c0_i32 = arith.constant 0 : i32
    %c0_i32_0 = arith.constant 0 : i32
    %c0_i32_1 = arith.constant 0 : i32
    return %c0_i32, %c0_i32_0 : i32, i32
  }
  func.func @transform_2(%arg0: i32) -> (i32, i32) {
    %c0_i32 = arith.constant 0 : i32
    %c0_i32_0 = arith.constant 0 : i32
    %c0_i32_1 = arith.constant 0 : i32
    return %c0_i32, %c0_i32_0 : i32, i32
  }
  func.func @transform_3(%arg0: i32) -> (i32, i32) {
    %c0_i32 = arith.constant 0 : i32
    %c0_i32_0 = arith.constant 0 : i32
    %c0_i32_1 = arith.constant 0 : i32
    return %c0_i32, %c0_i32_0 : i32, i32
  }
  func.func @transform_4(%arg0: i32) -> (i32, i32) {
    %c0_i32 = arith.constant 0 : i32
    %c0_i32_0 = arith.constant 0 : i32
    %c0_i32_1 = arith.constant 0 : i32
    return %c0_i32, %c0_i32_0 : i32, i32
  }
  func.func @transform_5(%arg0: i32) -> (i32, i32) {
    %c0_i32 = arith.constant 0 : i32
    %c0_i32_0 = arith.constant 0 : i32
    %c0_i32_1 = arith.constant 0 : i32
    return %c0_i32, %c0_i32_0 : i32, i32
  }
  func.func @transform_6(%arg0: i32) -> (i32, i32) {
    %c0_i32 = arith.constant 0 : i32
    %c0_i32_0 = arith.constant 0 : i32
    %c0_i32_1 = arith.constant 0 : i32
    return %c0_i32, %c0_i32_0 : i32, i32
  }
  func.func @transform_7(%arg0: i32) -> (i32, i32) {
    %c0_i32 = arith.constant 0 : i32
    %c0_i32_0 = arith.constant 0 : i32
    return %arg0, %c0_i32 : i32, i32
  }
}

</mosaic_0001>

<llo_original>
// kernel: simple_fc_forward.1
$region0: #{simple_fc_forward.1}
  #allocation0 [shape = 'u32[]', space=smem, size = 0x4, offset = 0x4, fixed_abs, tag = 'smem constant byte address 0x4 - core index']
  #allocation1 [shape = 'u32[144,128]{1,0:T(1,128)}', space=vmem, size = 0x12000, scoped, tag = 'internal scratch']
  %s0 = inlined_call_operand.vmem [shape: bf16[16,128], index: 0, kind: input, shape index: {}]
  %s1 = inlined_call_operand.vmem [shape: bf16[128,128], index: 1, kind: input, shape index: {}]
  %s2 = inlined_call_operand.vmem [shape: f32[1,128], index: 2, kind: input, shape index: {}]
  %s3 = inlined_call_operand.vmem [shape: bf16[128,128], index: 3, kind: input, shape index: {}]
  %s4 = inlined_call_operand.vmem [shape: f32[1,128], index: 4, kind: input, shape index: {}]
  %s5 = inlined_call_operand.vmem [shape: bf16[128,128], index: 5, kind: input, shape index: {}]
  %s6 = inlined_call_operand.vmem [shape: f32[1,128], index: 6, kind: input, shape index: {}]
  %s7 = inlined_call_operand.hbm [shape: f32[16,128], index: 7, kind: output, shape index: {}]
  %s8 = sld [smem:[#allocation0]]
  $region38: #{simple_fc_forward.1} parent=0
    _
  %s10 = ssub.s32 1, %s8
  %s11 = scalar_select 0, %s10, %s8
  $region1: #{simple_fc_forward.1} parent=0
    #allocation2 [shape = 'u8[8192]{0}', space=vmem, size = 0x2000, scoped, tag = 'output window, operand 0, single buffered']
    #allocation3 [shape = 's32[1]{0}', space=sflag, size = 0x4, scoped, tag = 'scoped memory for simple_fc_forward.1']
    %12 = vsyncpa [#allocation3], 0
    // Predicated region
    $region2: #{simple_fc_forward.1} parent=1 // pred_check
      _
    $region3: #{simple_fc_forward.1} parent=1 // pred_check_branch
      %14 = sbr.rel (0) target = $region5
    $region4: #{simple_fc_forward.1} parent=1 // pred_region
      _
    $region5: #{simple_fc_forward.1} parent=1 // pred_fallthru
      _
    // Predicated region
    $region6: #{simple_fc_forward.1} parent=1 // pred_check
      _
    $region7: #{simple_fc_forward.1} parent=1 // pred_check_branch
      %16 = sbr.rel (0) target = $region9
    $region8: #{simple_fc_forward.1} parent=1 // pred_region
      _
    $region9: #{simple_fc_forward.1} parent=1 // pred_fallthru
      _
    // Predicated region
    $region10: #{simple_fc_forward.1} parent=1 // pred_check
      _
    $region11: #{simple_fc_forward.1} parent=1 // pred_check_branch
      %18 = sbr.rel (0) target = $region13
    $region12: #{simple_fc_forward.1} parent=1 // pred_region
      _
    $region13: #{simple_fc_forward.1} parent=1 // pred_fallthru
      _
    // Predicated region
    $region14: #{simple_fc_forward.1} parent=1 // pred_check
      _
    $region15: #{simple_fc_forward.1} parent=1 // pred_check_branch
      %20 = sbr.rel (0) target = $region17
    $region16: #{simple_fc_forward.1} parent=1 // pred_region
      _
    $region17: #{simple_fc_forward.1} parent=1 // pred_fallthru
      _
    // Predicated region
    $region18: #{simple_fc_forward.1} parent=1 // pred_check
      _
    $region19: #{simple_fc_forward.1} parent=1 // pred_check_branch
      %22 = sbr.rel (0) target = $region21
    $region20: #{simple_fc_forward.1} parent=1 // pred_region
      _
    $region21: #{simple_fc_forward.1} parent=1 // pred_fallthru
      _
    // Predicated region
    $region22: #{simple_fc_forward.1} parent=1 // pred_check
      _
    $region23: #{simple_fc_forward.1} parent=1 // pred_check_branch
      %24 = sbr.rel (0) target = $region25
    $region24: #{simple_fc_forward.1} parent=1 // pred_region
      _
    $region25: #{simple_fc_forward.1} parent=1 // pred_fallthru
      _
    // Predicated region
    $region26: #{simple_fc_forward.1} parent=1 // pred_check
      _
    $region27: #{simple_fc_forward.1} parent=1 // pred_check_branch
      %26 = sbr.rel (0) target = $region29
    $region28: #{simple_fc_forward.1} parent=1 // pred_region
      _
    $region29: #{simple_fc_forward.1} parent=1 // pred_fallthru
      _
    %v28 = vld [vmem:[%s0] sm:$0xf]
    %v29 = vld [vmem:[%s0 + $0x4] sm:$0xf]
    %v30 = vld [vmem:[%s1] sm:$0xf]
    %v31 = vld [vmem:[%s1 + $0x4] sm:$0xf]
    %v32 = vld [vmem:[%s1 + $0x8] sm:$0xf]
    %v33 = vld [vmem:[%s1 + $0xc] sm:$0xf]
    %v34 = vld [vmem:[%s1 + $0x10] sm:$0xf]
    %v35 = vld [vmem:[%s1 + $0x14] sm:$0xf]
    %v36 = vld [vmem:[%s1 + $0x18] sm:$0xf]
    %v37 = vld [vmem:[%s1 + $0x1c] sm:$0xf]
    %v38 = vld [vmem:[%s1 + $0x20] sm:$0xf]
    %v39 = vld [vmem:[%s1 + $0x24] sm:$0xf]
    %v40 = vld [vmem:[%s1 + $0x28] sm:$0xf]
    %v41 = vld [vmem:[%s1 + $0x2c] sm:$0xf]
    %v42 = vld [vmem:[%s1 + $0x30] sm:$0xf]
    %v43 = vld [vmem:[%s1 + $0x34] sm:$0xf]
    %v44 = vld [vmem:[%s1 + $0x38] sm:$0xf]
    %v45 = vld [vmem:[%s1 + $0x3c] sm:$0xf]
    %v46 = vld [vmem:[%s2] sm:$0x1]
    %v48 = vlaneseq
    %v49 = vshrl.u32 %v48, 7
    %v50 = vsub.s32 0, %v49
    %v51 = vrot.slane %v46, %v50
    %v55 = vunpack.c.l.b16 %v28
    %v56 = vunpack.c.l.b16 %v29
    %v57 = vpack.c.b16 %v56, %v55
    %v75 = vunpack.c.l.b16 %v30
    %v76 = vunpack.c.l.b16 %v31
    %v77 = vunpack.c.l.b16 %v32
    %v78 = vunpack.c.l.b16 %v33
    %v79 = vunpack.c.l.b16 %v34
    %v80 = vunpack.c.l.b16 %v35
    %v81 = vunpack.c.l.b16 %v36
    %v82 = vunpack.c.l.b16 %v37
    %v83 = vunpack.c.l.b16 %v38
    %v84 = vunpack.c.l.b16 %v39
    %v85 = vunpack.c.l.b16 %v40
    %v86 = vunpack.c.l.b16 %v41
    %v87 = vunpack.c.l.b16 %v42
    %v88 = vunpack.c.l.b16 %v43
    %v89 = vunpack.c.l.b16 %v44
    %v90 = vunpack.c.l.b16 %v45
    %v91 = vpack.c.b16 %v76, %v75
    %v92 = vpack.c.b16 %v78, %v77
    %v93 = vpack.c.b16 %v80, %v79
    %v94 = vpack.c.b16 %v82, %v81
    %v95 = vpack.c.b16 %v84, %v83
    %v96 = vpack.c.b16 %v86, %v85
    %v97 = vpack.c.b16 %v88, %v87
    %v98 = vpack.c.b16 %v90, %v89
    %107 = vmatprep.subr.bf16.mxu0 0
    %108 = vmatpush1.bf16.msra.mxu0 %v91
    %109 = vmatprep.subr.bf16.mxu0 0
    %110 = vmatpush1.bf16.msra.mxu0 %v92
    %111 = vmatprep.subr.bf16.mxu0 0
    %112 = vmatpush1.bf16.msra.mxu0 %v93
    %113 = vmatprep.subr.bf16.mxu0 0
    %114 = vmatpush1.bf16.msra.mxu0 %v94
    %115 = vmatprep.subr.bf16.mxu0 0
    %116 = vmatpush1.bf16.msra.mxu0 %v95
    %117 = vmatprep.subr.bf16.mxu0 0
    %118 = vmatpush1.bf16.msra.mxu0 %v96
    %119 = vmatprep.subr.bf16.mxu0 0
    %120 = vmatpush1.bf16.msra.mxu0 %v97
    %121 = vmatprep.subr.bf16.mxu0 0
    %122 = vmatpush1.bf16.msra.mxu0 %v98
    %123 = vmatprep.subr.bf16.mxu0 0
    %124 = vmatpush1.bf16.msra.mxu0 0
    %125 = vmatprep.subr.bf16.mxu0 0
    %126 = vmatpush1.bf16.msra.mxu0 0
    %127 = vmatprep.subr.bf16.mxu0 0
    %128 = vmatpush1.bf16.msra.mxu0 0
    %129 = vmatprep.subr.bf16.mxu0 0
    %130 = vmatpush1.bf16.msra.mxu0 0
    %131 = vmatprep.subr.bf16.mxu0 0
    %132 = vmatpush1.bf16.msra.mxu0 0
    %133 = vmatprep.subr.bf16.mxu0 0
    %134 = vmatpush1.bf16.msra.mxu0 0
    %135 = vmatprep.subr.bf16.mxu0 0
    %136 = vmatpush1.bf16.msra.mxu0 0
    %137 = vmatprep.subr.bf16.mxu0 0
    %138 = vmatpush1.bf16.msra.mxu0 0
    %139 = vmatprep.mubr.bf16.mxu0 0
    %140 = vmatmul.mubr.bf16.gmra.mrb[0].mxu0 %v57
    %v141 = vpop.f32.mrb[0].mxu0
    %v142 = vadd.f32 %v51, %v141
    %v143 = vpop.f32.mrb[0].mxu0
    %v144 = vpop.f32.mrb[0].mxu0
    %v145 = vadd.f32 %v51, %v144
    %v146 = vpop.f32.mrb[0].mxu0
    %147 = vdwg.mxu0
    %v148 = vmax.f32 %v142, 0.0
    %v149 = vmax.f32 %v145, 0.0
    %v150 = vpack.c.bf16 %v149, %v148
    %v151 = vld [vmem:[%s3] sm:$0xf]
    %v152 = vld [vmem:[%s3 + $0x4] sm:$0xf]
    %v153 = vld [vmem:[%s3 + $0x8] sm:$0xf]
    %v154 = vld [vmem:[%s3 + $0xc] sm:$0xf]
    %v155 = vld [vmem:[%s3 + $0x10] sm:$0xf]
    %v156 = vld [vmem:[%s3 + $0x14] sm:$0xf]
    %v157 = vld [vmem:[%s3 + $0x18] sm:$0xf]
    %v158 = vld [vmem:[%s3 + $0x1c] sm:$0xf]
    %v159 = vld [vmem:[%s3 + $0x20] sm:$0xf]
    %v160 = vld [vmem:[%s3 + $0x24] sm:$0xf]
    %v161 = vld [vmem:[%s3 + $0x28] sm:$0xf]
    %v162 = vld [vmem:[%s3 + $0x2c] sm:$0xf]
    %v163 = vld [vmem:[%s3 + $0x30] sm:$0xf]
    %v164 = vld [vmem:[%s3 + $0x34] sm:$0xf]
    %v165 = vld [vmem:[%s3 + $0x38] sm:$0xf]
    %v166 = vld [vmem:[%s3 + $0x3c] sm:$0xf]
    %v167 = vld [vmem:[%s4] sm:$0x1]
    %v169 = vlaneseq
    %v170 = vshrl.u32 %v169, 7
    %v171 = vsub.s32 0, %v170
    %v172 = vrot.slane %v167, %v171
    %v190 = vunpack.c.l.b16 %v151
    %v191 = vunpack.c.l.b16 %v152
    %v192 = vunpack.c.l.b16 %v153
    %v193 = vunpack.c.l.b16 %v154
    %v194 = vunpack.c.l.b16 %v155
    %v195 = vunpack.c.l.b16 %v156
    %v196 = vunpack.c.l.b16 %v157
    %v197 = vunpack.c.l.b16 %v158
    %v198 = vunpack.c.l.b16 %v159
    %v199 = vunpack.c.l.b16 %v160
    %v200 = vunpack.c.l.b16 %v161
    %v201 = vunpack.c.l.b16 %v162
    %v202 = vunpack.c.l.b16 %v163
    %v203 = vunpack.c.l.b16 %v164
    %v204 = vunpack.c.l.b16 %v165
    %v205 = vunpack.c.l.b16 %v166
    %v206 = vpack.c.b16 %v191, %v190
    %v207 = vpack.c.b16 %v193, %v192
    %v208 = vpack.c.b16 %v195, %v194
    %v209 = vpack.c.b16 %v197, %v196
    %v210 = vpack.c.b16 %v199, %v198
    %v211 = vpack.c.b16 %v201, %v200
    %v212 = vpack.c.b16 %v203, %v202
    %v213 = vpack.c.b16 %v205, %v204
    %222 = vmatprep.subr.bf16.mxu0 0
    %223 = vmatpush1.bf16.msra.mxu0 %v206
    %224 = vmatprep.subr.bf16.mxu0 0
    %225 = vmatpush1.bf16.msra.mxu0 %v207
    %226 = vmatprep.subr.bf16.mxu0 0
    %227 = vmatpush1.bf16.msra.mxu0 %v208
    %228 = vmatprep.subr.bf16.mxu0 0
    %229 = vmatpush1.bf16.msra.mxu0 %v209
    %230 = vmatprep.subr.bf16.mxu0 0
    %231 = vmatpush1.bf16.msra.mxu0 %v210
    %232 = vmatprep.subr.bf16.mxu0 0
    %233 = vmatpush1.bf16.msra.mxu0 %v211
    %234 = vmatprep.subr.bf16.mxu0 0
    %235 = vmatpush1.bf16.msra.mxu0 %v212
    %236 = vmatprep.subr.bf16.mxu0 0
    %237 = vmatpush1.bf16.msra.mxu0 %v213
    %238 = vmatprep.subr.bf16.mxu0 0
    %239 = vmatpush1.bf16.msra.mxu0 0
    %240 = vmatprep.subr.bf16.mxu0 0
    %241 = vmatpush1.bf16.msra.mxu0 0
    %242 = vmatprep.subr.bf16.mxu0 0
    %243 = vmatpush1.bf16.msra.mxu0 0
    %244 = vmatprep.subr.bf16.mxu0 0
    %245 = vmatpush1.bf16.msra.mxu0 0
    %246 = vmatprep.subr.bf16.mxu0 0
    %247 = vmatpush1.bf16.msra.mxu0 0
    %248 = vmatprep.subr.bf16.mxu0 0
    %249 = vmatpush1.bf16.msra.mxu0 0
    %250 = vmatprep.subr.bf16.mxu0 0
    %251 = vmatpush1.bf16.msra.mxu0 0
    %252 = vmatprep.subr.bf16.mxu0 0
    %253 = vmatpush1.bf16.msra.mxu0 0
    %254 = vmatprep.mubr.bf16.mxu0 0
    %255 = vmatmul.mubr.bf16.gmra.mrb[0].mxu0 %v150
    %v256 = vpop.f32.mrb[0].mxu0
    %v257 = vadd.f32 %v172, %v256
    %v258 = vpop.f32.mrb[0].mxu0
    %v259 = vpop.f32.mrb[0].mxu0
    %v260 = vadd.f32 %v172, %v259
    %v261 = vpop.f32.mrb[0].mxu0
    %262 = vdwg.mxu0
    %v263 = vmax.f32 %v257, 0.0
    %v264 = vmax.f32 %v260, 0.0
    %v265 = vpack.c.bf16 %v264, %v263
    %v266 = vld [vmem:[%s5] sm:$0xf]
    %v267 = vld [vmem:[%s5 + $0x4] sm:$0xf]
    %v268 = vld [vmem:[%s5 + $0x8] sm:$0xf]
    %v269 = vld [vmem:[%s5 + $0xc] sm:$0xf]
    %v270 = vld [vmem:[%s5 + $0x10] sm:$0xf]
    %v271 = vld [vmem:[%s5 + $0x14] sm:$0xf]
    %v272 = vld [vmem:[%s5 + $0x18] sm:$0xf]
    %v273 = vld [vmem:[%s5 + $0x1c] sm:$0xf]
    %v274 = vld [vmem:[%s5 + $0x20] sm:$0xf]
    %v275 = vld [vmem:[%s5 + $0x24] sm:$0xf]
    %v276 = vld [vmem:[%s5 + $0x28] sm:$0xf]
    %v277 = vld [vmem:[%s5 + $0x2c] sm:$0xf]
    %v278 = vld [vmem:[%s5 + $0x30] sm:$0xf]
    %v279 = vld [vmem:[%s5 + $0x34] sm:$0xf]
    %v280 = vld [vmem:[%s5 + $0x38] sm:$0xf]
    %v281 = vld [vmem:[%s5 + $0x3c] sm:$0xf]
    %v282 = vld [vmem:[%s6] sm:$0x1]
    %v284 = vlaneseq
    %v285 = vshrl.u32 %v284, 7
    %v286 = vsub.s32 0, %v285
    %v287 = vrot.slane %v282, %v286
    %v305 = vunpack.c.l.b16 %v266
    %v306 = vunpack.c.l.b16 %v267
    %v307 = vunpack.c.l.b16 %v268
    %v308 = vunpack.c.l.b16 %v269
    %v309 = vunpack.c.l.b16 %v270
    %v310 = vunpack.c.l.b16 %v271
    %v311 = vunpack.c.l.b16 %v272
    %v312 = vunpack.c.l.b16 %v273
    %v313 = vunpack.c.l.b16 %v274
    %v314 = vunpack.c.l.b16 %v275
    %v315 = vunpack.c.l.b16 %v276
    %v316 = vunpack.c.l.b16 %v277
    %v317 = vunpack.c.l.b16 %v278
    %v318 = vunpack.c.l.b16 %v279
    %v319 = vunpack.c.l.b16 %v280
    %v320 = vunpack.c.l.b16 %v281
    %v321 = vpack.c.b16 %v306, %v305
    %v322 = vpack.c.b16 %v308, %v307
    %v323 = vpack.c.b16 %v310, %v309
    %v324 = vpack.c.b16 %v312, %v311
    %v325 = vpack.c.b16 %v314, %v313
    %v326 = vpack.c.b16 %v316, %v315
    %v327 = vpack.c.b16 %v318, %v317
    %v328 = vpack.c.b16 %v320, %v319
    %337 = vmatprep.subr.bf16.mxu0 0
    %338 = vmatpush1.bf16.msra.mxu0 %v321
    %339 = vmatprep.subr.bf16.mxu0 0
    %340 = vmatpush1.bf16.msra.mxu0 %v322
    %341 = vmatprep.subr.bf16.mxu0 0
    %342 = vmatpush1.bf16.msra.mxu0 %v323
    %343 = vmatprep.subr.bf16.mxu0 0
    %344 = vmatpush1.bf16.msra.mxu0 %v324
    %345 = vmatprep.subr.bf16.mxu0 0
    %346 = vmatpush1.bf16.msra.mxu0 %v325
    %347 = vmatprep.subr.bf16.mxu0 0
    %348 = vmatpush1.bf16.msra.mxu0 %v326
    %349 = vmatprep.subr.bf16.mxu0 0
    %350 = vmatpush1.bf16.msra.mxu0 %v327
    %351 = vmatprep.subr.bf16.mxu0 0
    %352 = vmatpush1.bf16.msra.mxu0 %v328
    %353 = vmatprep.subr.bf16.mxu0 0
    %354 = vmatpush1.bf16.msra.mxu0 0
    %355 = vmatprep.subr.bf16.mxu0 0
    %356 = vmatpush1.bf16.msra.mxu0 0
    %357 = vmatprep.subr.bf16.mxu0 0
    %358 = vmatpush1.bf16.msra.mxu0 0
    %359 = vmatprep.subr.bf16.mxu0 0
    %360 = vmatpush1.bf16.msra.mxu0 0
    %361 = vmatprep.subr.bf16.mxu0 0
    %362 = vmatpush1.bf16.msra.mxu0 0
    %363 = vmatprep.subr.bf16.mxu0 0
    %364 = vmatpush1.bf16.msra.mxu0 0
    %365 = vmatprep.subr.bf16.mxu0 0
    %366 = vmatpush1.bf16.msra.mxu0 0
    %367 = vmatprep.subr.bf16.mxu0 0
    %368 = vmatpush1.bf16.msra.mxu0 0
    %369 = vmatprep.mubr.bf16.mxu0 0
    %370 = vmatmul.mubr.bf16.gmra.mrb[0].mxu0 %v265
    %v371 = vpop.f32.mrb[0].mxu0
    %v372 = vadd.f32 %v287, %v371
    %v373 = vpop.f32.mrb[0].mxu0
    %v374 = vpop.f32.mrb[0].mxu0
    %v375 = vadd.f32 %v287, %v374
    %v376 = vpop.f32.mrb[0].mxu0
    %377 = vdwg.mxu0
    %378 = vst [vmem:[#allocation2] sm:$0xff] %v372
    %379 = vst [vmem:[#allocation2 + $0x8] sm:$0xff] %v375
    // Predicated region
    $region30: #{simple_fc_forward.1} parent=1 // pred_check
      _
    $region31: #{simple_fc_forward.1} parent=1 // pred_check_branch
      %381 = sbr.rel (0) target = $region33
    $region32: #{simple_fc_forward.1} parent=1 // pred_region
      %s383 = ssub.s32 256, 256
      %384 = vsyncadd [#allocation3], %s383
      %s385 = sshll.u32 [#allocation2], 4
      %s386 = int_to_ptr.vmem [resolvable:$true] %s385
      %391 = dma.vmem_to_hbm [thread:$0]  %s386, 256, %s7, [#allocation3], 128, 128, 8
    $region33: #{simple_fc_forward.1} parent=1 // pred_fallthru
      _
    // Predicated region
    $region34: #{simple_fc_forward.1} parent=1 // pred_check
      _
    $region35: #{simple_fc_forward.1} parent=1 // pred_check_branch
      %393 = sbr.rel (0) target = $region37
    $region36: #{simple_fc_forward.1} parent=1 // pred_region
      %394 = dma.done [#allocation3], 256
    $region37: #{simple_fc_forward.1} parent=1 // pred_fallthru
      _
    %395 = vsyncpa [#allocation3], 1

</llo_original>
